<compile_context>
chip_gen: v7x
topology: tpu7x:2x2x1
jax: 0.10.0
libtpu: 0.0.40
codegen_flags: <defaults>
</compile_context>

<pallas_src>
import jax
import jax.numpy as jnp
from jax.experimental import pallas as pl
from jax.experimental.pallas import tpu as pltpu

_LANES = 128                      # last block dim -> full lane width
_MAX_TILE_BYTES = 2 * 1024 * 1024 # ~2 MiB per block (8 MiB dbl-buffered i/o)
_SMALL_N = 1 << 16                # below this, fused XLA elementwise wins


def _pow3_kernel(x_ref, o_ref):
    x = x_ref[...]
    x2 = x * x
    o_ref[...] = x2 * x


def _round_up(v: int, m: int) -> int:
    return ((v + m - 1) // m) * m


def pow3(x: jax.Array, *, force_pallas: bool = False) -> jax.Array:
    """Elementwise x ** 3.0 via a tiled, lane-dense Pallas kernel."""
    orig_shape = x.shape
    n = x.size
    if n == 0:
        return x

    # Match torch.pow(int_tensor, 3.0) -> float promotion; F32 passes through.
    if not jnp.issubdtype(x.dtype, jnp.floating):
        x = x.astype(jnp.float32)
    dtype = x.dtype
    itemsize = jnp.dtype(dtype).itemsize

    # Tiny inputs: pallas_call launch + reshape plumbing dominates; a fused
    # XLA elementwise op is strictly faster. Tests pass force_pallas=True.
    if n < _SMALL_N and not force_pallas:
        return (x * x * x).reshape(orig_shape)

    sublane = max(8, 32 // itemsize)        # 8 f32, 16 bf16, 32 int8/fp8
    max_tile_r = max(sublane, _MAX_TILE_BYTES // (_LANES * itemsize))

    if n % _LANES == 0:
        # Fast path: free metadata reshape, no pad, no post-kernel slice.
        rows = n // _LANES
        slab = x.reshape(rows, _LANES)
        pad_tail = False
    else:
        rows = pl.cdiv(n, _LANES)
        flat = x.reshape(-1)
        flat = jnp.pad(flat, (0, rows * _LANES - n))   # <= 127 elements
        slab = flat.reshape(rows, _LANES)
        pad_tail = True

    # Pick tile_r: full-extent for small row counts (block == array dims is
    # always legal), otherwise aim for >= 2 grid steps (v7x dual-TC) while
    # capping block bytes; ragged tail block is masked by Pallas.
    if rows <= sublane:
        tile_r = rows
    else:
        half = _round_up(pl.cdiv(rows, 2), sublane)
        tile_r = min(max_tile_r, half)

    grid = (pl.cdiv(rows, tile_r),)
    out = pl.pallas_call(
        _pow3_kernel,
        out_shape=jax.ShapeDtypeStruct((rows, _LANES), dtype),
        grid=grid,
        in_specs=[pl.BlockSpec((tile_r, _LANES), lambda i: (i, 0))],
        out_specs=pl.BlockSpec((tile_r, _LANES), lambda i: (i, 0)),
        compiler_params=pltpu.CompilerParams(
            dimension_semantics=("parallel",)),
    )(slab)

    if pad_tail:
        return out.reshape(-1)[:n].reshape(orig_shape)
    return out.reshape(orig_shape)


if __name__ == "__main__":
    key = jax.random.PRNGKey(0)

    # Primary: small rank-2 F32 input consistent with Pow_F32_R2_3.
    # (Lane-aligned: exercises the zero-copy fast path inside the kernel.)
    x = jax.random.normal(key, (8, 128), dtype=jnp.float32)
    y = pow3(x, force_pallas=True)
    jax.block_until_ready(y)
    ref = jnp.power(x, 3.0)
    assert y.shape == ref.shape and y.dtype == ref.dtype
    assert jnp.allclose(y, ref, rtol=1e-6, atol=1e-6)

    # Default (non-forced) path on the same input: jnp fallback must match.
    y_fast = pow3(x)
    jax.block_until_ready(y_fast)
    assert jnp.allclose(y_fast, ref, rtol=1e-6, atol=1e-6)

    # Odd (non-128-multiple) rank-2 shape exercises the lane-pad tail path.
    x2 = jax.random.normal(jax.random.PRNGKey(1), (5, 37), dtype=jnp.float32)
    y2 = pow3(x2, force_pallas=True)
    jax.block_until_ready(y2)
    ref2 = jnp.power(x2, 3.0)
    assert y2.shape == ref2.shape and y2.dtype == ref2.dtype
    assert jnp.allclose(y2, ref2, rtol=1e-6, atol=1e-6)

    # Medium unaligned shape: multi-step grid + ragged final block.
    x3 = jax.random.normal(jax.random.PRNGKey(2), (300, 200), dtype=jnp.float32)
    y3 = pow3(x3, force_pallas=True)
    jax.block_until_ready(y3)
    ref3 = jnp.power(x3, 3.0)
    assert y3.shape == ref3.shape and y3.dtype == ref3.dtype
    assert jnp.allclose(y3, ref3, rtol=1e-6, atol=1e-6)

    print("KERNEL_OK")
</pallas_src>

<mosaic_0001>
module attributes {stable_mosaic.version = 11 : i64} {
  func.func @_pow3_kernel(%arg0: i32, %arg1: memref<8x128xf32, #tpu.memory_space<vmem>>, %arg2: memref<8x128xf32, #tpu.memory_space<vmem>>) attributes {dimension_semantics = [#tpu.dimension_semantics<parallel>], iteration_bounds = array<i64: 1>, scalar_prefetch = 0 : i64, scratch_operands = 0 : i64, tpu.core_type = #tpu.core_type<tc>, window_params = [{transform_indices = @transform_0, window_bounds = array<i64: 8, 128>}, {transform_indices = @transform_1, window_bounds = array<i64: 8, 128>}]} {
    %c0 = arith.constant 0 : index
    %c0_0 = arith.constant 0 : index
    %0 = vector.load %arg1[%c0, %c0_0] : memref<8x128xf32, #tpu.memory_space<vmem>>, vector<8x128xf32>
    %1 = arith.mulf %0, %0 : vector<8x128xf32>
    %2 = arith.mulf %1, %0 : vector<8x128xf32>
    %c0_1 = arith.constant 0 : index
    %c0_2 = arith.constant 0 : index
    %3 = vector.load %arg2[%c0_1, %c0_2] : memref<8x128xf32, #tpu.memory_space<vmem>>, vector<8x128xf32>
    tpu.vector_store %arg2[%c0_1, %c0_2], %2 {strides = array<i32>} : memref<8x128xf32, #tpu.memory_space<vmem>>, vector<8x128xf32>,
    return
  }
  func.func @transform_0(%arg0: i32) -> (i32, i32) {
    %c0_i32 = arith.constant 0 : i32
    %c0_i32_0 = arith.constant 0 : i32
    return %arg0, %c0_i32 : i32, i32
  }
  func.func @transform_1(%arg0: i32) -> (i32, i32) {
    %c0_i32 = arith.constant 0 : i32
    %c0_i32_0 = arith.constant 0 : i32
    return %arg0, %c0_i32 : i32, i32
  }
}

</mosaic_0001>

<llo_original>
// kernel: tpu_custom_call.1
$region0: #{tpu_custom_call.1}
  #allocation0 [shape = 'u32[]', space=smem, size = 0x4, offset = 0x4, fixed_abs, tag = 'smem constant byte address 0x4 - core index']
  #allocation1 [shape = 'u32[144,128]{1,0:T(1,128)}', space=vmem, size = 0x12000, scoped, tag = 'internal scratch']
  %s0 = inlined_call_operand.hbm [shape: f32[8,128], index: 0, kind: input, shape index: {}]
  %s1 = inlined_call_operand.hbm [shape: f32[8,128], index: 1, kind: output, shape index: {}]
  %s2 = sld [smem:[#allocation0]]
  $region18: #{tpu_custom_call.1} parent=0
    _
  %s4 = ssub.s32 1, %s2
  %s5 = scalar_select 0, %s4, %s2
  $region1: #{tpu_custom_call.1} parent=0
    #allocation2 [shape = 'u8[4096]{0}', space=vmem, size = 0x1000, scoped, tag = 'input window, operand 0, single buffered']
    #allocation3 [shape = 's32[1]{0}', space=sflag, size = 0x4, scoped, tag = 'scoped memory for tpu_custom_call.1']
    #allocation4 [shape = 's32[1]{0}', space=sflag, size = 0x4, scoped, tag = 'scoped memory for tpu_custom_call.1']
    #allocation5 [shape = 'u8[4096]{0}', space=vmem, size = 0x1000, scoped, tag = 'output window, operand 0, single buffered']
    %6 = vsyncpa [#allocation3], 0
    %7 = vsyncpa [#allocation4], 0
    // Predicated region
    $region2: #{tpu_custom_call.1} parent=1 // pred_check
      _
    $region3: #{tpu_custom_call.1} parent=1 // pred_check_branch
      %9 = sbr.rel (0) target = $region5
    $region4: #{tpu_custom_call.1} parent=1 // pred_region
      %s11 = ssub.s32 128, 128
      %12 = vsyncadd [#allocation3], %s11
      %s14 = sshll.u32 [#allocation2], 4
      %s15 = int_to_ptr.vmem [resolvable:$true] %s14
      %17 = dma.hbm_to_vmem [thread:$0]  %s0, 128, %s15, [#allocation3]
    $region5: #{tpu_custom_call.1} parent=1 // pred_fallthru
      _
    // Predicated region
    $region6: #{tpu_custom_call.1} parent=1 // pred_check
      _
    $region7: #{tpu_custom_call.1} parent=1 // pred_check_branch
      %19 = sbr.rel (0) target = $region9
    $region8: #{tpu_custom_call.1} parent=1 // pred_region
      %20 = dma.done [#allocation3], 128
    $region9: #{tpu_custom_call.1} parent=1 // pred_fallthru
      _
    %v21 = vld [vmem:[#allocation2] sm:$0xff]
    %v22 = vmul.f32 %v21, %v21
    %v23 = vmul.f32 %v22, %v21
    %24 = vst [vmem:[#allocation5] sm:$0xff] %v23
    // Predicated region
    $region10: #{tpu_custom_call.1} parent=1 // pred_check
      _
    $region11: #{tpu_custom_call.1} parent=1 // pred_check_branch
      %26 = sbr.rel (0) target = $region13
    $region12: #{tpu_custom_call.1} parent=1 // pred_region
      %s28 = ssub.s32 128, 128
      %29 = vsyncadd [#allocation4], %s28
      %s31 = sshll.u32 [#allocation5], 4
      %s32 = int_to_ptr.vmem [resolvable:$true] %s31
      %34 = dma.vmem_to_hbm [thread:$0]  %s32, 128, %s1, [#allocation4]
    $region13: #{tpu_custom_call.1} parent=1 // pred_fallthru
      _
    // Predicated region
    $region14: #{tpu_custom_call.1} parent=1 // pred_check
      _
    $region15: #{tpu_custom_call.1} parent=1 // pred_check_branch
      %36 = sbr.rel (0) target = $region17
    $region16: #{tpu_custom_call.1} parent=1 // pred_region
      %37 = dma.done [#allocation4], 128
    $region17: #{tpu_custom_call.1} parent=1 // pred_fallthru
      _
    %38 = vsyncpa [#allocation3], 1
    %39 = vsyncpa [#allocation4], 1

</llo_original>
